<compile_context>
chip_gen: v5e
topology: v5e:2x2
jax: 0.10.0
libtpu: 0.0.40
codegen_flags: <defaults>
</compile_context>

<pallas_src>
import functools
import numpy as np
import jax
import jax.numpy as jnp
from jax.experimental import pallas as pl
from jax.experimental.pallas import tpu as pltpu


def make_positional_encoding(d_model: int, max_len: int = 5000,
                             dtype=jnp.float32) -> jnp.ndarray:
    """(max_len, 1, d_model) sinusoidal table, same recipe as the torch init.

    Store it in the model dtype so the forward pass never has to cast it.
    """
    position = np.arange(0, max_len, dtype=np.float32)[:, None]          # (L, 1)
    div_term = np.exp(np.arange(0, d_model, 2, dtype=np.float32)
                      * (-np.log(10000.0) / d_model))
    pe = np.zeros((max_len, d_model), dtype=np.float32)
    pe[:, 0::2] = np.sin(position * div_term)
    if d_model % 2:
        pe[:, 1::2] = np.cos(position * div_term[: d_model // 2])
    else:
        pe[:, 1::2] = np.cos(position * div_term)
    return jnp.asarray(pe[:, None, :], dtype=dtype)                      # (L, 1, D)


# ----------------------------------------------------------------------------
# Kernels
# ----------------------------------------------------------------------------

def _pe_add_kernel_3d(x_ref, pe_ref, o_ref):
    # x_ref: (tile_s, B, D); pe_ref: (tile_s, 1, D) -> broadcasts over batch.
    o_ref[...] = (x_ref[...] + pe_ref[...]).astype(o_ref.dtype)


def _pe_add_kernel_2d(x_ref, pe_ref, o_ref, *, B):
    # x_ref: (tile_s, B*D); pe_ref: (tile_s, D).  Replicate pe across the batch
    # in-kernel (lane concat is free filler in a DMA-bound kernel) instead of
    # pre-broadcasting an S*B*D array in HBM.
    pe = pe_ref[...]
    if B > 1:
        pe = jnp.concatenate([pe] * B, axis=-1)          # (tile_s, B*D)
    o_ref[...] = (x_ref[...] + pe).astype(o_ref.dtype)


# ----------------------------------------------------------------------------
# Wrapper
# ----------------------------------------------------------------------------

def _tpu_tuning():
    """(target_block_bytes, vmem_budget_bytes, vmem_limit_bytes|None) per gen."""
    try:
        kind = jax.devices()[0].device_kind.lower()
    except Exception:  # pragma: no cover - fall back to conservative settings
        kind = ""
    if "v7" in kind:
        # 3.2 TB/s HBM, 64 MiB VMEM: bigger blocks amortize the ~0.35us step
        # overhead; raise the scoped-VMEM limit but stay well under physical.
        return 8 << 20, 36 << 20, 48 << 20
    if "v6" in kind or "trillium" in kind:
        # 32 MiB default scoped limit: 4 double-buffered blocks of 4 MiB fit.
        return 4 << 20, 24 << 20, None
    # v5e / unknown: 16 MiB default scoped limit -> keep 2 MiB blocks.
    return 2 << 20, 12 << 20, None


def positional_encoding_forward(x: jnp.ndarray, pe: jnp.ndarray, *,
                                target_block_bytes: int | None = None,
                                vmem_budget_bytes: int | None = None,
                                donate_x: bool = False) -> jnp.ndarray:
    """x: (S, B, D), pe: (max_len, 1, D).  Returns x + pe[:S]."""
    S, B, D = x.shape
    max_len = pe.shape[0]
    assert pe.shape == (max_len, 1, D) and max_len >= S
    if pe.dtype != x.dtype:
        # Glue only; keep the buffer in the model dtype to avoid this pass.
        pe = pe.astype(x.dtype)

    auto_target, auto_budget, vmem_limit = _tpu_tuning()
    target = int(target_block_bytes if target_block_bytes is not None else auto_target)
    budget = int(vmem_budget_bytes if vmem_budget_bytes is not None else auto_budget)

    itemsize = jnp.dtype(x.dtype).itemsize
    sub = 8 * max(1, 4 // itemsize)        # sublane pack: 8 f32 / 16 bf16 / 32 i8
    aliases = {0: 0} if donate_x else {}
    cp_kwargs = dict(dimension_semantics=("parallel",))
    if vmem_limit is not None:
        cp_kwargs["vmem_limit_bytes"] = int(vmem_limit)
    cparams = pltpu.CompilerParams(**cp_kwargs)

    # 2-D lane-dense path only when D is not lane-aligned but B*D is, and the
    # sequence length keeps every pe block (8,128)-legal.
    lane_dense_2d = (D % 128 != 0) and ((B * D) % 128 == 0) and (S % 8 == 0)

    if lane_dense_2d:
        x2 = x.reshape(S, B * D)                       # layout no-op view
        pe2 = pe.reshape(max_len, D)                   # squeeze middle dim
        x_row = B * D * itemsize                       # lane-dense, no padding
        pe_row = (-(-D // 128) * 128) * itemsize
        vmem_per_row = 2 * (2 * x_row + pe_row)        # 2x(x + out) + 2x pe
        tile_s = min(S, max(1, min(target // x_row, max(1, budget // vmem_per_row))))
        if tile_s < S:
            tile_s = max(8, (tile_s // 8) * 8)         # sublane multiple
        tile_s = int(min(tile_s, S))
        grid = (pl.cdiv(S, tile_s),)
        out2 = pl.pallas_call(
            functools.partial(_pe_add_kernel_2d, B=B),
            out_shape=jax.ShapeDtypeStruct((S, B * D), x.dtype),
            grid_spec=pltpu.PrefetchScalarGridSpec(
                num_scalar_prefetch=0,
                grid=grid,
                in_specs=[
                    pl.BlockSpec((tile_s, B * D), lambda i: (i, 0)),
                    pl.BlockSpec((tile_s, D), lambda i: (i, 0)),   # [:S] via index_map
                ],
                out_specs=pl.BlockSpec((tile_s, B * D), lambda i: (i, 0)),
            ),
            compiler_params=cparams,
            input_output_aliases=aliases,
        )(x2, pe2)
        return out2.reshape(S, B, D)

    # 3-D path: last two block dims equal the full (B, D) / (1, D) extents, so
    # the S-axis tile size is unconstrained by the (8,128) rule.
    pad_B = -(-B // sub) * sub
    pad_D = -(-D // 128) * 128
    x_row = pad_B * pad_D * itemsize                   # padded VMEM bytes / seq row
    pe_row = sub * pad_D * itemsize                    # B-dim of 1 pads to sub
    vmem_per_row = 2 * (2 * x_row + pe_row)            # double-buffered x, out, pe
    tile_s = int(min(S, max(1, min(target // x_row, max(1, budget // vmem_per_row)))))
    grid = (pl.cdiv(S, tile_s),)
    return pl.pallas_call(
        _pe_add_kernel_3d,
        out_shape=jax.ShapeDtypeStruct((S, B, D), x.dtype),
        grid_spec=pltpu.PrefetchScalarGridSpec(
            num_scalar_prefetch=0,
            grid=grid,
            in_specs=[
                pl.BlockSpec((tile_s, B, D), lambda i: (i, 0, 0)),
                pl.BlockSpec((tile_s, 1, D), lambda i: (i, 0, 0)),  # [:S] via index_map
            ],
            out_specs=pl.BlockSpec((tile_s, B, D), lambda i: (i, 0, 0)),
        ),
        compiler_params=cparams,
        input_output_aliases=aliases,
    )(x, pe)


if __name__ == "__main__":
    MAX_LEN = 128
    key = jax.random.PRNGKey(0)
    k1, k2, k3, k4, k5 = jax.random.split(key, 5)

    def check(x, pe, rtol=1e-5, atol=1e-5, **kw):
        ref = np.asarray(x.astype(jnp.float32) + pe[: x.shape[0]].astype(jnp.float32))
        out = jax.block_until_ready(positional_encoding_forward(x, pe, **kw))
        np.testing.assert_allclose(np.asarray(out.astype(jnp.float32)), ref,
                                   rtol=rtol, atol=atol)

    # 1) toy shape implied by the module: seq=8, batch=2, d_model=32 (3-D path).
    x1 = jax.random.normal(k1, (8, 2, 32), dtype=jnp.float32)
    check(x1, make_positional_encoding(32, MAX_LEN))

    # 2) lane-dense 2-D path: B*D = 128, pe tiled across B in-kernel.
    x2 = jax.random.normal(k2, (16, 4, 32), dtype=jnp.float32)
    check(x2, make_positional_encoding(32, MAX_LEN))

    # 3) multi-tile pipelined 3-D path (tiny block target forces grid > 1).
    x3 = jax.random.normal(k3, (40, 2, 128), dtype=jnp.float32)
    check(x3, make_positional_encoding(128, MAX_LEN), target_block_bytes=8192)

    # 4) multi-tile lane-dense 2-D path.
    x4 = jax.random.normal(k4, (40, 4, 32), dtype=jnp.float32)
    check(x4, make_positional_encoding(32, MAX_LEN), target_block_bytes=4096)

    # 5) bf16 activations with a bf16 pe buffer (no in-forward cast).
    x5 = jax.random.normal(k5, (8, 2, 32), dtype=jnp.bfloat16)
    check(x5, make_positional_encoding(32, MAX_LEN, dtype=jnp.bfloat16),
          rtol=1e-2, atol=1e-2)

    print("KERNEL_OK")
</pallas_src>

<mosaic_0001>
module attributes {stable_mosaic.version = 11 : i64} {
  func.func @_pe_add_kernel_3d(%arg0: i32, %arg1: memref<8x2x32xf32, #tpu.memory_space<vmem>>, %arg2: memref<8x1x32xf32, #tpu.memory_space<vmem>>, %arg3: memref<8x2x32xf32, #tpu.memory_space<vmem>>) attributes {dimension_semantics = [#tpu.dimension_semantics<parallel>], iteration_bounds = array<i64: 1>, scalar_prefetch = 0 : i64, scratch_operands = 0 : i64, tpu.core_type = #tpu.core_type<tc>, window_params = [{transform_indices = @transform_0, window_bounds = array<i64: 8, 2, 32>}, {transform_indices = @transform_1, window_bounds = array<i64: 8, 1, 32>}, {transform_indices = @transform_2, window_bounds = array<i64: 8, 2, 32>}]} {
    %c0 = arith.constant 0 : index
    %c0_0 = arith.constant 0 : index
    %c0_1 = arith.constant 0 : index
    %0 = vector.load %arg1[%c0, %c0_0, %c0_1] : memref<8x2x32xf32, #tpu.memory_space<vmem>>, vector<8x2x32xf32>
    %c0_2 = arith.constant 0 : index
    %c0_3 = arith.constant 0 : index
    %c0_4 = arith.constant 0 : index
    %1 = vector.load %arg2[%c0_2, %c0_3, %c0_4] : memref<8x1x32xf32, #tpu.memory_space<vmem>>, vector<8x1x32xf32>
    %2 = vector.broadcast %1 : vector<8x1x32xf32> to vector<8x2x32xf32>
    %3 = arith.addf %0, %2 : vector<8x2x32xf32>
    %c0_5 = arith.constant 0 : index
    %c0_6 = arith.constant 0 : index
    %c0_7 = arith.constant 0 : index
    %4 = vector.load %arg3[%c0_5, %c0_6, %c0_7] : memref<8x2x32xf32, #tpu.memory_space<vmem>>, vector<8x2x32xf32>
    tpu.vector_store %arg3[%c0_5, %c0_6, %c0_7], %3 {strides = array<i32>} : memref<8x2x32xf32, #tpu.memory_space<vmem>>, vector<8x2x32xf32>,
    return
  }
  func.func @transform_0(%arg0: i32) -> (i32, i32, i32) {
    %c0_i32 = arith.constant 0 : i32
    %c0_i32_0 = arith.constant 0 : i32
    %c0_i32_1 = arith.constant 0 : i32
    return %arg0, %c0_i32, %c0_i32_0 : i32, i32, i32
  }
  func.func @transform_1(%arg0: i32) -> (i32, i32, i32) {
    %c0_i32 = arith.constant 0 : i32
    %c0_i32_0 = arith.constant 0 : i32
    %c0_i32_1 = arith.constant 0 : i32
    return %arg0, %c0_i32, %c0_i32_0 : i32, i32, i32
  }
  func.func @transform_2(%arg0: i32) -> (i32, i32, i32) {
    %c0_i32 = arith.constant 0 : i32
    %c0_i32_0 = arith.constant 0 : i32
    %c0_i32_1 = arith.constant 0 : i32
    return %arg0, %c0_i32, %c0_i32_0 : i32, i32, i32
  }
}

</mosaic_0001>

<llo_original>
// kernel: tpu_custom_call.1
$region0: #{tpu_custom_call.1}
  #allocation0 [shape = 'u32[]', space=smem, size = 0x4, offset = 0x4, fixed_abs, tag = 'smem constant byte address 0x4 - core index']
  #allocation1 [shape = 'u32[72,128]{1,0:T(1,128)}', space=vmem, size = 0x9000, scoped, tag = 'internal scratch']
  %s0 = inlined_call_operand.vmem [shape: f32[8,2,32], index: 0, kind: input, shape index: {}]
  %s1 = inlined_call_operand.vmem [shape: f32[128,1,32], index: 1, kind: input, shape index: {}]
  %s2 = inlined_call_operand.hbm [shape: f32[8,2,32], index: 2, kind: output, shape index: {}]
  %s3 = sld [smem:[#allocation0]]
  $region18: #{tpu_custom_call.1} parent=0
    _
  %s5 = ssub.s32 1, %s3
  %s6 = scalar_select 0, %s5, %s3
  $region1: #{tpu_custom_call.1} parent=0
    #allocation2 [shape = 'u8[8192]{0}', space=vmem, size = 0x2000, scoped, tag = 'output window, operand 0, single buffered']
    #allocation3 [shape = 's32[1]{0}', space=sflag, size = 0x4, scoped, tag = 'scoped memory for tpu_custom_call.1']
    %7 = vsyncpa [#allocation3], 0
    // Predicated region
    $region2: #{tpu_custom_call.1} parent=1 // pred_check
      _
    $region3: #{tpu_custom_call.1} parent=1 // pred_check_branch
      %9 = sbr.rel (0) target = $region5
    $region4: #{tpu_custom_call.1} parent=1 // pred_region
      _
    $region5: #{tpu_custom_call.1} parent=1 // pred_fallthru
      _
    // Predicated region
    $region6: #{tpu_custom_call.1} parent=1 // pred_check
      _
    $region7: #{tpu_custom_call.1} parent=1 // pred_check_branch
      %11 = sbr.rel (0) target = $region9
    $region8: #{tpu_custom_call.1} parent=1 // pred_region
      _
    $region9: #{tpu_custom_call.1} parent=1 // pred_fallthru
      _
    %v12 = vld [vmem:[%s0] sm:$0x3]
    %v13 = vld [vmem:[%s0 + $0x2] sm:$0x3]
    %v14 = vld [vmem:[%s0 + $0x4] sm:$0x3]
    %v15 = vld [vmem:[%s0 + $0x6] sm:$0x3]
    %v16 = vld [vmem:[%s0 + $0x8] sm:$0x3]
    %v17 = vld [vmem:[%s0 + $0xa] sm:$0x3]
    %v18 = vld [vmem:[%s0 + $0xc] sm:$0x3]
    %v19 = vld [vmem:[%s0 + $0xe] sm:$0x3]
    %v20 = vld [vmem:[%s1] sm:$0x1]
    %v21 = vld [vmem:[%s1 + $0x1] sm:$0x1]
    %v22 = vld [vmem:[%s1 + $0x2] sm:$0x1]
    %v23 = vld [vmem:[%s1 + $0x3] sm:$0x1]
    %v24 = vld [vmem:[%s1 + $0x4] sm:$0x1]
    %v25 = vld [vmem:[%s1 + $0x5] sm:$0x1]
    %v26 = vld [vmem:[%s1 + $0x6] sm:$0x1]
    %v27 = vld [vmem:[%s1 + $0x7] sm:$0x1]
    %v36 = vperm.slane %v20, 0
    %v37 = vperm.slane %v21, 0
    %v38 = vperm.slane %v22, 0
    %v39 = vperm.slane %v23, 0
    %v40 = vperm.slane %v24, 0
    %v41 = vperm.slane %v25, 0
    %v42 = vperm.slane %v26, 0
    %v43 = vperm.slane %v27, 0
    %v52 = vadd.f32 %v12, %v36
    %v53 = vadd.f32 %v13, %v37
    %v54 = vadd.f32 %v14, %v38
    %v55 = vadd.f32 %v15, %v39
    %v56 = vadd.f32 %v16, %v40
    %v57 = vadd.f32 %v17, %v41
    %v58 = vadd.f32 %v18, %v42
    %v59 = vadd.f32 %v19, %v43
    %vm60 = vcmask 254976
    %61 = vst.msk [vmem:[#allocation2] sm:$0x3] %vm60, %v52
    %62 = vst.msk [vmem:[#allocation2 + $0x2] sm:$0x3] %vm60, %v53
    %63 = vst.msk [vmem:[#allocation2 + $0x4] sm:$0x3] %vm60, %v54
    %64 = vst.msk [vmem:[#allocation2 + $0x6] sm:$0x3] %vm60, %v55
    %65 = vst.msk [vmem:[#allocation2 + $0x8] sm:$0x3] %vm60, %v56
    %66 = vst.msk [vmem:[#allocation2 + $0xa] sm:$0x3] %vm60, %v57
    %67 = vst.msk [vmem:[#allocation2 + $0xc] sm:$0x3] %vm60, %v58
    %68 = vst.msk [vmem:[#allocation2 + $0xe] sm:$0x3] %vm60, %v59
    // Predicated region
    $region10: #{tpu_custom_call.1} parent=1 // pred_check
      _
    $region11: #{tpu_custom_call.1} parent=1 // pred_check_branch
      %70 = sbr.rel (0) target = $region13
    $region12: #{tpu_custom_call.1} parent=1 // pred_region
      %72 = vsyncadd [#allocation3], 0
      %s73 = sshll.u32 [#allocation2], 4
      %s74 = int_to_ptr.vmem [resolvable:$true] %s73
      %s75 = sshll.u32 %s2, 4
      %s76 = int_to_ptr.hbm [resolvable:$true] %s75
      %81 = dma.vmem_to_hbm [thread:$0]  %s74, 256, %s76, [#allocation3], 32, 32, 2
    $region13: #{tpu_custom_call.1} parent=1 // pred_fallthru
      _
    // Predicated region
    $region14: #{tpu_custom_call.1} parent=1 // pred_check
      _
    $region15: #{tpu_custom_call.1} parent=1 // pred_check_branch
      %83 = sbr.rel (0) target = $region17
    $region16: #{tpu_custom_call.1} parent=1 // pred_region
      %85 = dma.done [#allocation3], 256
    $region17: #{tpu_custom_call.1} parent=1 // pred_fallthru
      _
    %86 = vsyncpa [#allocation3], 1

</llo_original>
